<compile_context>
chip_gen: v7x
topology: tpu7x:2x2x1
jax: 0.10.0
libtpu: 0.0.40
codegen_flags: <defaults>
</compile_context>

<pallas_src>
import functools
import math

import jax
import jax.numpy as jnp
from jax.experimental import pallas as pl
from jax.experimental.pallas import tpu as pltpu


def _lcm(a, b):
    return a * b // math.gcd(a, b)


def _round_up(x, m):
    return ((x + m - 1) // m) * m


def _num_tensorcores() -> int:
    """Best-effort TensorCores-per-chip query; defaults to 2 (v7x/v4/v5p)."""
    try:
        info = pltpu.get_tpu_info()
        for name in ("num_cores", "core_count", "num_tensorcores",
                     "tensor_core_count", "cores_per_chip"):
            v = getattr(info, name, None)
            if isinstance(v, int) and 1 <= v <= 8:
                return v
    except Exception:
        pass
    try:
        kind = jax.devices()[0].device_kind.lower()
        if any(s in kind for s in ("v5e", "v5 lite", "v5lite",
                                   "v6e", "v6 lite", "v6lite")):
            return 1  # single-TensorCore chips: avoid a serialized 2-way split
    except Exception:
        pass
    return 2


def _focal_kernel(x_ref, t_ref, p_ref, o_ref, acc_ref, *,
                  gamma, total_valid, tile_r, lanes, tiles_per_core):
    c = pl.program_id(0)   # TensorCore split ("parallel")
    j = pl.program_id(1)   # row-tile reduction axis ("arbitrary")

    @pl.when(j == 0)
    def _():
        acc_ref[...] = jnp.zeros_like(acc_ref)

    x = x_ref[...].astype(jnp.float32)      # (tile_r, lanes) logits
    t = t_ref[...].astype(jnp.float32)      # (tile_r, lanes) binary targets
    a = p_ref[0:1, :]                       # (1, lanes) alpha per lane
    cfa = p_ref[1:2, :]                     # (1, lanes) 1 - 2*alpha per lane

    # Numerically stable BCE-with-logits (reduction='none'):
    #   bce = max(x, 0) - x*t + log1p(exp(-|x|))
    e = jnp.exp(-jnp.abs(x))                # the only exp through the EUP
    bce = jnp.maximum(x, 0.0) - x * t + jnp.log1p(e)

    # pt = exp(-bce) without a second exp.  For binary targets:
    #   pt = sigmoid((2t-1)*x) = where((1-2t)*x > 0, e, 1) / (1 + e)
    s = (1.0 - 2.0 * t) * x
    pt = jnp.where(s > 0.0, e, 1.0) * pl.reciprocal(1.0 + e, approx=True)

    # at = [alpha, 1-alpha].gather(0, t.long())  ==  alpha + t*(1-2*alpha)
    at = a + t * cfa

    q = 1.0 - pt
    if gamma == 2:
        qg = q * q                          # keep the power on the 4-wide VALU
    elif float(gamma) == int(gamma):
        qg = q ** int(gamma)                # integer_pow -> chained muls
    else:
        qg = q ** jnp.float32(gamma)        # TODO(synk): non-integer gamma takes the pow (log/exp) EUP path

    f = at * qg * bce                       # (tile_r, lanes)

    # Global flat-element range covered by this block.
    base_row = (c * tiles_per_core + j) * tile_r
    needs_mask = (base_row + tile_r) * lanes > total_valid
    full_rows = total_valid // lanes
    rem = total_valid % lanes

    # Gated tail mask: only boundary / surplus blocks pay for iota+cmp+select.
    @pl.when(needs_mask)
    def _():
        row = base_row + jax.lax.broadcasted_iota(jnp.int32, f.shape, 0)
        if rem == 0:
            valid = row < full_rows
        else:
            lane = jax.lax.broadcasted_iota(jnp.int32, f.shape, 1)
            valid = jnp.logical_or(row < full_rows,
                                   jnp.logical_and(row == full_rows, lane < rem))
        fm = jnp.where(valid, f, 0.0)       # select (not multiply): garbage-safe
        acc_ref[...] += jnp.sum(fm, axis=0, keepdims=True)

    @pl.when(jnp.logical_not(needs_mask))
    def _():
        acc_ref[...] += jnp.sum(f, axis=0, keepdims=True)

    @pl.when(j == tiles_per_core - 1)
    def _():
        part = jnp.sum(acc_ref[...])        # collapse exactly once per core
        # Lane-dense unmasked store, executed once per core.
        o_ref[...] = jnp.full(o_ref.shape, part, dtype=o_ref.dtype)


def adaptative_weighted_focal_loss(inputs, targets, alpha=None, gamma=2, *,
                                   tile_rows=None):
    """inputs, targets: (N, K); alpha: (K,) or None. Returns scalar f32 loss.

    targets must be binary {0,1}; they may be int8/bf16 to cut HBM traffic.
    """
    N, K = inputs.shape
    assert targets.shape == (N, K)

    if alpha is None:
        # torch fallback: alpha = sum(targets, dim=0) / N
        alpha = jnp.sum(targets.astype(jnp.float32), axis=0) / jnp.float32(N)
    a_vec = jnp.asarray(alpha, jnp.float32).reshape(-1)
    assert a_vec.size == K

    x_it = inputs.dtype.itemsize
    t_it = targets.dtype.itemsize

    # ---- zero-copy lane-dense layout: view row-major (N,K) as (R, L) -------
    L = _lcm(K, 128)                 # lanes per row; class of lane j is j % K
    total = N * K                    # number of valid elements
    x_flat = inputs.reshape(-1)
    t_flat = targets.reshape(-1)
    R = pl.cdiv(total, L)
    padded = R * L
    if padded != total:
        # TODO(synk): rare fallback for shapes where N*K % lcm(K,128) != 0 —
        # costs one extra HBM pass; lcm-friendly shapes never hit this.
        x_flat = jnp.pad(x_flat, (0, padded - total))
        t_flat = jnp.pad(t_flat, (0, padded - total))
    x2 = x_flat.reshape(R, L)
    t2 = t_flat.reshape(R, L)

    a_lane = jnp.tile(a_vec, L // K)                               # (L,)
    params = jnp.stack([a_lane, 1.0 - 2.0 * a_lane], axis=0)       # (2, L)

    # ---- tile sizing with an explicit VMEM budget ---------------------------
    GRAN = 32                        # sublane granule safe for f32/bf16/int8
    VMEM_BUDGET = 24 * 1024 * 1024   # streaming buffers budget (ok on v7x 64MiB)
    if tile_rows is None:
        tile_rows = (3 * 1024 * 1024) // (L * 4)     # ~3 MiB of f32 logits/tile
    per_row_stream = 2 * L * (x_it + t_it)           # double-buffered inputs
    tile_rows = min(int(tile_rows), max(GRAN, VMEM_BUDGET // per_row_stream))
    tile_rows = min(tile_rows, _round_up(R, GRAN))   # never exceed the data
    tile_rows = max(GRAN, (tile_rows // GRAN) * GRAN)

    num_cores = _num_tensorcores()
    tiles_total = pl.cdiv(R, tile_rows)
    tiles_per_core = pl.cdiv(tiles_total, num_cores)

    kernel = functools.partial(_focal_kernel, gamma=gamma, total_valid=total,
                               tile_r=tile_rows, lanes=L,
                               tiles_per_core=tiles_per_core)

    def data_map(c, j):
        # Clamp so no grid step issues a fully out-of-bounds DMA; surplus
        # blocks re-read the last tile and are fully masked in-kernel.
        return (jnp.minimum(c * tiles_per_core + j, tiles_total - 1), 0)

    stream_bytes = 2 * tile_rows * L * (x_it + t_it)
    vmem_limit = int(max(16 << 20, min(32 << 20, stream_bytes + (8 << 20))))

    partial_sums = pl.pallas_call(
        kernel,
        out_shape=jax.ShapeDtypeStruct((num_cores, 8, 128), jnp.float32),
        grid_spec=pltpu.PrefetchScalarGridSpec(
            num_scalar_prefetch=0,
            grid=(num_cores, tiles_per_core),
            in_specs=[
                pl.BlockSpec((tile_rows, L), data_map),        # logits tile
                pl.BlockSpec((tile_rows, L), data_map),        # targets tile
                pl.BlockSpec((2, L), lambda c, j: (0, 0)),     # [alpha; 1-2a] (resident)
            ],
            out_specs=pl.BlockSpec((1, 8, 128), lambda c, j: (c, 0, 0)),
            scratch_shapes=[pltpu.VMEM((1, L), jnp.float32)],  # tiny accumulator
        ),
        compiler_params=pltpu.CompilerParams(
            dimension_semantics=("parallel", "arbitrary"),
            vmem_limit_bytes=vmem_limit,
        ),
        cost_estimate=pl.CostEstimate(
            flops=20 * total,
            transcendentals=3 * total,                 # exp, log1p, reciprocal
            bytes_accessed=(x2.size * x_it + t2.size * t_it
                            + params.size * 4 + num_cores * 8 * 128 * 4),
        ),
    )(x2, t2, params)

    # mean_k(mean_n(.)) == sum / (N*K) since every class shares the same N.
    return partial_sums[:, 0, 0].sum() / jnp.float32(total)


def _reference(inputs, targets, alpha, gamma):
    # Pure-JAX reference mirroring the PyTorch per-class loop.
    x = inputs.astype(jnp.float32)
    t = targets.astype(jnp.float32)
    bce = jnp.maximum(x, 0.0) - x * t + jnp.log1p(jnp.exp(-jnp.abs(x)))
    pt = jnp.exp(-bce)
    at = jnp.where(t < 1.0, alpha[None, :], 1.0 - alpha[None, :])
    f = at * (1.0 - pt) ** gamma * bce
    k_losses = jnp.mean(f, axis=0)   # per-class mean over N
    return jnp.mean(k_losses)        # mean over K


if __name__ == "__main__":
    key = jax.random.PRNGKey(0)
    k1, k2 = jax.random.split(key)

    # Small demo shapes: N*K = 4224 -> 33 rows of 128 lanes (K=16 divides 128).
    N, K = 264, 16
    gamma = 2

    inputs = jax.random.normal(k1, (N, K), dtype=jnp.float32)                # logits
    targets_f32 = jax.random.bernoulli(k2, 0.5, (N, K)).astype(jnp.float32)  # binary targets
    targets = targets_f32.astype(jnp.int8)   # 0/1 exact; 1 B/elem streamed
    alpha = (jnp.arange(K, dtype=jnp.float32) + 1.0) / (K + 1.0)

    ref = _reference(inputs, targets_f32, alpha, gamma)

    # Run 1: small explicit tile -> exercises multi-tile accumulation, the
    # gated tail-mask path and (on multi-TC chips) both core partial sums.
    loss_small = adaptative_weighted_focal_loss(inputs, targets, alpha, gamma,
                                                tile_rows=32)
    loss_small = jax.block_until_ready(loss_small)
    assert jnp.isfinite(loss_small), loss_small
    # approx=True reciprocal inside the kernel -> loose tolerance vs exact ref
    assert jnp.allclose(loss_small, ref, rtol=5e-2, atol=1e-5), (loss_small, ref)

    # Run 2: default (production) tile sizing -> single large tile here,
    # exercises the index-clamped surplus-block path on multi-TC chips.
    loss = adaptative_weighted_focal_loss(inputs, targets, alpha, gamma)
    loss = jax.block_until_ready(loss)
    assert jnp.isfinite(loss), loss
    assert jnp.allclose(loss, ref, rtol=5e-2, atol=1e-5), (loss, ref)

    print("KERNEL_OK")
</pallas_src>

<mosaic_0001>
module attributes {stable_mosaic.version = 11 : i64} {
  func.func @_focal_kernel(%arg0: i32, %arg1: i32, %arg2: memref<32x128xf32, #tpu.memory_space<vmem>>, %arg3: memref<32x128xi8, #tpu.memory_space<vmem>>, %arg4: memref<2x128xf32, #tpu.memory_space<vmem>>, %arg5: memref<1x8x128xf32, #tpu.memory_space<vmem>>, %arg6: memref<1x128xf32, #tpu.memory_space<vmem>>) attributes {dimension_semantics = [#tpu.dimension_semantics<parallel>, #tpu.dimension_semantics<arbitrary>], iteration_bounds = array<i64: 2, 1>, scalar_prefetch = 0 : i64, scratch_operands = 1 : i64, tpu.core_type = #tpu.core_type<tc>, window_params = [{transform_indices = @transform_0, window_bounds = array<i64: 32, 128>}, {transform_indices = @transform_1, window_bounds = array<i64: 32, 128>}, {pipeline_mode = #tpu.pipeline_mode<synchronous>, transform_indices = @transform_2, window_bounds = array<i64: 2, 128>}, {transform_indices = @transform_3, window_bounds = array<i64: 1, 8, 128>}]} {
    %c0_i32 = arith.constant 0 : i32
    %0 = arith.cmpi eq, %arg1, %c0_i32 : i32
    %1 = arith.extui %0 : i1 to i32
    %c0_i32_0 = arith.constant 0 : i32
    %2 = arith.cmpi ne, %1, %c0_i32_0 : i32
    scf.if %2 {
      %cst_19 = arith.constant 0.000000e+00 : f32
      %54 = vector.broadcast %cst_19 : f32 to vector<1x128xf32>
      %c0_20 = arith.constant 0 : index
      %c0_21 = arith.constant 0 : index
      %55 = vector.load %arg6[%c0_20, %c0_21] : memref<1x128xf32, #tpu.memory_space<vmem>>, vector<1x128xf32>
      tpu.vector_store %arg6[%c0_20, %c0_21], %54 {strides = array<i32>} : memref<1x128xf32, #tpu.memory_space<vmem>>, vector<1x128xf32>,
    } else {
    }
    %c0 = arith.constant 0 : index
    %c0_1 = arith.constant 0 : index
    %3 = vector.load %arg2[%c0, %c0_1] : memref<32x128xf32, #tpu.memory_space<vmem>>, vector<32x128xf32>
    %c0_2 = arith.constant 0 : index
    %c0_3 = arith.constant 0 : index
    %4 = vector.load %arg3[%c0_2, %c0_3] : memref<32x128xi8, #tpu.memory_space<vmem>>, vector<32x128xi8>
    %5 = arith.sitofp %4 : vector<32x128xi8> to vector<32x128xf32>
    %c0_4 = arith.constant 0 : index
    %c0_5 = arith.constant 0 : index
    %6 = vector.load %arg4[%c0_4, %c0_5] : memref<2x128xf32, #tpu.memory_space<vmem>>, vector<1x128xf32>
    %c1 = arith.constant 1 : index
    %c0_6 = arith.constant 0 : index
    %7 = vector.load %arg4[%c1, %c0_6] : memref<2x128xf32, #tpu.memory_space<vmem>>, vector<1x128xf32>
    %8 = math.absf %3 : vector<32x128xf32>
    %cst = arith.constant 0.000000e+00 : f32
    %9 = vector.broadcast %cst : f32 to vector<32x128xf32>
    %10 = arith.subf %9, %8 : vector<32x128xf32>
    %11 = math.exp %10 : vector<32x128xf32>
    %cst_7 = arith.constant 0.000000e+00 : f32
    %12 = vector.broadcast %cst_7 : f32 to vector<32x128xf32>
    %13 = arith.maximumf %3, %12 : vector<32x128xf32>
    %14 = arith.mulf %3, %5 : vector<32x128xf32>
    %15 = arith.subf %13, %14 : vector<32x128xf32>
    %16 = math.log1p %11 : vector<32x128xf32>
    %17 = arith.addf %15, %16 : vector<32x128xf32>
    %cst_8 = arith.constant 2.000000e+00 : f32
    %18 = vector.broadcast %cst_8 : f32 to vector<32x128xf32>
    %19 = arith.mulf %18, %5 : vector<32x128xf32>
    %cst_9 = arith.constant 1.000000e+00 : f32
    %20 = vector.broadcast %cst_9 : f32 to vector<32x128xf32>
    %21 = arith.subf %20, %19 : vector<32x128xf32>
    %22 = arith.mulf %21, %3 : vector<32x128xf32>
    %cst_10 = arith.constant 0.000000e+00 : f32
    %23 = vector.broadcast %cst_10 : f32 to vector<32x128xf32>
    %24 = arith.cmpf ogt, %22, %23 : vector<32x128xf32>
    %cst_11 = arith.constant 1.000000e+00 : f32
    %25 = vector.broadcast %cst_11 : f32 to vector<32x128xf32>
    %26 = arith.select %24, %11, %25 : vector<32x128xi1>, vector<32x128xf32>
    %cst_12 = arith.constant 1.000000e+00 : f32
    %27 = vector.broadcast %cst_12 : f32 to vector<32x128xf32>
    %28 = arith.addf %27, %11 : vector<32x128xf32>
    %29 = tpu.reciprocal %28 {approx = true} : vector<32x128xf32> -> vector<32x128xf32>
    %30 = arith.mulf %26, %29 : vector<32x128xf32>
    %31 = vector.broadcast %7 : vector<1x128xf32> to vector<32x128xf32>
    %32 = arith.mulf %5, %31 : vector<32x128xf32>
    %33 = vector.broadcast %6 : vector<1x128xf32> to vector<32x128xf32>
    %34 = arith.addf %33, %32 : vector<32x128xf32>
    %cst_13 = arith.constant 1.000000e+00 : f32
    %35 = vector.broadcast %cst_13 : f32 to vector<32x128xf32>
    %36 = arith.subf %35, %30 : vector<32x128xf32>
    %37 = arith.mulf %36, %36 : vector<32x128xf32>
    %38 = arith.mulf %34, %37 : vector<32x128xf32>
    %39 = arith.mulf %38, %17 : vector<32x128xf32>
    %c1_i32 = arith.constant 1 : i32
    %40 = arith.muli %arg0, %c1_i32 : i32
    %41 = arith.addi %40, %arg1 : i32
    %c32_i32 = arith.constant 32 : i32
    %42 = arith.muli %41, %c32_i32 : i32
    %c32_i32_14 = arith.constant 32 : i32
    %43 = arith.addi %42, %c32_i32_14 : i32
    %c128_i32 = arith.constant 128 : i32
    %44 = arith.muli %43, %c128_i32 : i32
    %c4224_i32 = arith.constant 4224 : i32
    %45 = arith.cmpi sgt, %44, %c4224_i32 : i32
    %46 = arith.extui %45 : i1 to i32
    %c0_i32_15 = arith.constant 0 : i32
    %47 = arith.cmpi ne, %46, %c0_i32_15 : i32
    scf.if %47 {
      %54 = tpu.iota {dimensions = array<i32: 0>} : vector<32x128xi32>
      %55 = vector.broadcast %42 : i32 to vector<32x128xi32>
      %56 = arith.addi %55, %54 : vector<32x128xi32>
      %c33_i32 = arith.constant 33 : i32
      %57 = vector.broadcast %c33_i32 : i32 to vector<32x128xi32>
      %58 = arith.cmpi slt, %56, %57 : vector<32x128xi32>
      %cst_19 = arith.constant 0.000000e+00 : f32
      %59 = vector.broadcast %cst_19 : f32 to vector<32x128xf32>
      %60 = arith.select %58, %39, %59 : vector<32x128xi1>, vector<32x128xf32>
      %c0_20 = arith.constant 0 : index
      %c0_21 = arith.constant 0 : index
      %61 = vector.load %arg6[%c0_20, %c0_21] : memref<1x128xf32, #tpu.memory_space<vmem>>, vector<1x128xf32>
      %cst_22 = arith.constant dense<0.000000e+00> : vector<128xf32>
      %62 = vector.multi_reduction <add>, %60, %cst_22 [0] : vector<32x128xf32> to vector<128xf32>
      %63 = vector.shape_cast %62 : vector<128xf32> to vector<1x128xf32>
      %64 = arith.addf %61, %63 : vector<1x128xf32>
      %c0_23 = arith.constant 0 : index
      %c0_24 = arith.constant 0 : index
      %65 = vector.load %arg6[%c0_23, %c0_24] : memref<1x128xf32, #tpu.memory_space<vmem>>, vector<1x128xf32>
      tpu.vector_store %arg6[%c0_23, %c0_24], %64 {strides = array<i32>} : memref<1x128xf32, #tpu.memory_space<vmem>>, vector<1x128xf32>,
    } else {
    }
    %true = arith.constant true
    %48 = arith.xori %45, %true : i1
    %49 = arith.extui %48 : i1 to i32
    %c0_i32_16 = arith.constant 0 : i32
    %50 = arith.cmpi ne, %49, %c0_i32_16 : i32
    scf.if %50 {
      %c0_19 = arith.constant 0 : index
      %c0_20 = arith.constant 0 : index
      %54 = vector.load %arg6[%c0_19, %c0_20] : memref<1x128xf32, #tpu.memory_space<vmem>>, vector<1x128xf32>
      %cst_21 = arith.constant dense<0.000000e+00> : vector<128xf32>
      %55 = vector.multi_reduction <add>, %39, %cst_21 [0] : vector<32x128xf32> to vector<128xf32>
      %56 = vector.shape_cast %55 : vector<128xf32> to vector<1x128xf32>
      %57 = arith.addf %54, %56 : vector<1x128xf32>
      %c0_22 = arith.constant 0 : index
      %c0_23 = arith.constant 0 : index
      %58 = vector.load %arg6[%c0_22, %c0_23] : memref<1x128xf32, #tpu.memory_space<vmem>>, vector<1x128xf32>
      tpu.vector_store %arg6[%c0_22, %c0_23], %57 {strides = array<i32>} : memref<1x128xf32, #tpu.memory_space<vmem>>, vector<1x128xf32>,
    } else {
    }
    %c0_i32_17 = arith.constant 0 : i32
    %51 = arith.cmpi eq, %arg1, %c0_i32_17 : i32
    %52 = arith.extui %51 : i1 to i32
    %c0_i32_18 = arith.constant 0 : i32
    %53 = arith.cmpi ne, %52, %c0_i32_18 : i32
    scf.if %53 {
      %c0_19 = arith.constant 0 : index
      %c0_20 = arith.constant 0 : index
      %54 = vector.load %arg6[%c0_19, %c0_20] : memref<1x128xf32, #tpu.memory_space<vmem>>, vector<1x128xf32>
      %55 = vector.shape_cast %54 : vector<1x128xf32> to vector<1x1x128xf32>
      %cst_21 = arith.constant dense<0.000000e+00> : vector<1xf32>
      %56 = vector.multi_reduction <add>, %55, %cst_21 [1, 2] : vector<1x1x128xf32> to vector<1xf32>
      %57 = vector.shape_cast %56 : vector<1xf32> to vector<1x1x1xf32>
      %58 = vector.extract %57[0, 0, 0] : f32 from vector<1x1x1xf32>
      %59 = vector.broadcast %58 : f32 to vector<1x8x128xf32>
      %c0_22 = arith.constant 0 : index
      %c0_23 = arith.constant 0 : index
      %c0_24 = arith.constant 0 : index
      %60 = vector.load %arg5[%c0_22, %c0_23, %c0_24] : memref<1x8x128xf32, #tpu.memory_space<vmem>>, vector<1x8x128xf32>
      tpu.vector_store %arg5[%c0_22, %c0_23, %c0_24], %59 {strides = array<i32>} : memref<1x8x128xf32, #tpu.memory_space<vmem>>, vector<1x8x128xf32>,
    } else {
    }
    return
  }
  func.func @transform_0(%arg0: i32, %arg1: i32) -> (i32, i32) {
    %c1_i32 = arith.constant 1 : i32
    %0 = arith.muli %arg0, %c1_i32 : i32
    %1 = arith.addi %0, %arg1 : i32
    %c1_i32_0 = arith.constant 1 : i32
    %2 = arith.minsi %1, %c1_i32_0 : i32
    %c0_i32 = arith.constant 0 : i32
    %c0_i32_1 = arith.constant 0 : i32
    return %2, %c0_i32 : i32, i32
  }
  func.func @transform_1(%arg0: i32, %arg1: i32) -> (i32, i32) {
    %c1_i32 = arith.constant 1 : i32
    %0 = arith.muli %arg0, %c1_i32 : i32
    %1 = arith.addi %0, %arg1 : i32
    %c1_i32_0 = arith.constant 1 : i32
    %2 = arith.minsi %1, %c1_i32_0 : i32
    %c0_i32 = arith.constant 0 : i32
    %c0_i32_1 = arith.constant 0 : i32
    return %2, %c0_i32 : i32, i32
  }
  func.func @transform_2(%arg0: i32, %arg1: i32) -> (i32, i32) {
    %c0_i32 = arith.constant 0 : i32
    %c0_i32_0 = arith.constant 0 : i32
    %c0_i32_1 = arith.constant 0 : i32
    return %c0_i32, %c0_i32_0 : i32, i32
  }
  func.func @transform_3(%arg0: i32, %arg1: i32) -> (i32, i32, i32) {
    %c0_i32 = arith.constant 0 : i32
    %c0_i32_0 = arith.constant 0 : i32
    %c0_i32_1 = arith.constant 0 : i32
    return %arg0, %c0_i32, %c0_i32_0 : i32, i32, i32
  }
}

</mosaic_0001>

<llo_original>
// kernel: tpu_custom_call.1
$region0: #{tpu_custom_call.1}
  #allocation0 [shape = 'u32[]', space=smem, size = 0x4, offset = 0x4, fixed_abs, tag = 'smem constant byte address 0x4 - core index']
  #allocation1 [shape = 'u32[144,128]{1,0:T(1,128)}', space=vmem, size = 0x12000, scoped, tag = 'internal scratch']
  #allocation2 [shape = 'f32[1,128]{1,0:T(1,128)}', space=vmem, size = 0x200, scoped, tag = 'scratch operand']
  %s0 = inlined_call_operand.hbm [shape: f32[33,128], index: 0, kind: input, shape index: {}]
  %s1 = inlined_call_operand.hbm [shape: s8[33,128], index: 1, kind: input, shape index: {}]
  %s2 = inlined_call_operand.vmem [shape: f32[2,128], index: 2, kind: input, shape index: {}]
  %s3 = inlined_call_operand.hbm [shape: f32[2,8,128], index: 3, kind: output, shape index: {}]
  %s4 = sld [smem:[#allocation0]]
  $region69: #{tpu_custom_call.1} parent=0
    _
  %s6 = ssub.s32 1, %s4
  %s7 = scalar_select 0, %s6, %s4
  $region1: #{tpu_custom_call.1} parent=0
    #allocation3 [shape = 'u8[32768]{0}', space=vmem, size = 0x8000, scoped, tag = 'input window, operand 0']
    #allocation4 [shape = 's32[2]{0}', space=sflag, size = 0x8, scoped, tag = 'scoped memory for tpu_custom_call.1']
    #allocation5 [shape = 's32[2]{0}', space=sflag, size = 0x8, scoped, tag = 'scoped memory for tpu_custom_call.1']
    #allocation6 [shape = 'u8[8192]{0}', space=vmem, size = 0x2000, scoped, tag = 'input window, operand 1']
    #allocation7 [shape = 's32[2]{0}', space=sflag, size = 0x8, scoped, tag = 'scoped memory for tpu_custom_call.1']
    #allocation8 [shape = 'u8[8192]{0}', space=vmem, size = 0x2000, scoped, tag = 'output window, operand 0']
    %8 = vsyncpa [#allocation4], 0
    %s9 = scalar_lea.sflag [#allocation4], 1
    %10 = vsyncpa %s9, 0
    %11 = vsyncpa [#allocation7], 0
    %s12 = scalar_lea.sflag [#allocation7], 1
    %13 = vsyncpa %s12, 0
    %14 = vsyncpa [#allocation5], 0
    %s15 = scalar_lea.sflag [#allocation5], 1
    %16 = vsyncpa %s15, 0
    loop: start=0, step=1, limit=4
    $region2: #{tpu_custom_call.1} parent=1 // loop_pre_header
      _
    $region3: #{tpu_custom_call.1} parent=1 // loop_header
      %s18 = sphi 0, %s22
      %p19 = scmp.ge.s32.totalorder %s18, 4
      %s25 = sphi 0, %s37
      %s26 = sphi 0, %s33
      %s27 = sphi 0, %s25
      %s28 = sphi 0, %s26
      %s29 = sphi 0, %s27
      %s30 = sphi 0, %s28
      %s46 = sphi 0, %s48
      %s49 = sphi 0, %s46
      %s50 = sphi 0, %s49
      %s66 = sphi 0, %s50
      %s78 = sphi 0, %s80
      %s81 = sphi 0, %s78
      %s82 = sphi 0, %s81
      %s98 = sphi 0, %s82
      %s102 = sphi 0, %s102
      %s104 = sphi 0, %s102
      %s105 = sphi 0, %s104
      %s119 = sphi 0, %s105
      %s125 = sphi 0, %s127
      %s128 = sphi 0, %s125
      %s129 = sphi 0, %s128
      %s145 = sphi 0, %s129
    $region4: #{tpu_custom_call.1} parent=1 // loop_header_branch
      %21 = sbr.rel (%p19) target = $region8
    $region5: #{tpu_custom_call.1} parent=1 // loop_body
      %s23 = ssub.s32 %s18, 1
      %s24 = ssub.s32 %s18, 2
      %s31 = sadd.s32 1, %s26
      %p32 = scmp.ge.s32.totalorder %s31, 1
      %s33 = scalar_select %p32, 0, %s31
      %s34 = sadd.s32 1, %s25
      %s35 = scalar_select %p32, %s34, %s25
      %p36 = scmp.ge.s32.totalorder %s35, 2
      %s37 = scalar_select %p36, 0, %s35
      %s38 = sadd.s32 %s25, %s26
      %p39 = scmp.lt.s32.totalorder %s38, 1
      %s40 = scalar_select %p39, %s38, 1
      %s41 = sadd.s32 %s37, %s33
      %p42 = scmp.lt.s32.totalorder %s41, 1
      %s43 = scalar_select %p42, %s41, 1
      %s44 = ssub.s32 %s40, %s43
      %p45 = scmp.eq.s32.totalorder %s44, 0
      %s47 = sadd.s32 %s46, 1
      %s48 = scalar_select %p45, %s46, %s47
      %p51 = pneg %p45
      %p52 = scmp.eq.s32.totalorder %s18, 1
      %p53 = por %p51, %p52
      %p54 = scmp.ne.s32.totalorder %s46, %s49
      %p55 = scmp.eq.s32.totalorder %s18, 0
      %p56 = por %p54, %p55
      %p57 = scmp.ne.s32.totalorder %s46, %s49
      %p58 = scmp.eq.s32.totalorder %s23, 1
      %p59 = por %p57, %p58
      %p60 = scmp.ne.s32.totalorder %s49, %s50
      %p61 = scmp.eq.s32.totalorder %s23, 0
      %p62 = por %p60, %p61
      %p63 = scmp.ne.s32.totalorder %s49, %s50
      %p64 = scmp.eq.s32.totalorder %s24, 1
      %p65 = por %p63, %p64
      %p67 = scmp.ne.s32.totalorder %s50, %s66
      %p68 = scmp.eq.s32.totalorder %s24, 0
      %p69 = por %p67, %p68
      %s70 = sadd.s32 %s25, %s26
      %p71 = scmp.lt.s32.totalorder %s70, 1
      %s72 = scalar_select %p71, %s70, 1
      %s73 = sadd.s32 %s37, %s33
      %p74 = scmp.lt.s32.totalorder %s73, 1
      %s75 = scalar_select %p74, %s73, 1
      %s76 = ssub.s32 %s72, %s75
      %p77 = scmp.eq.s32.totalorder %s76, 0
      %s79 = sadd.s32 %s78, 1
      %s80 = scalar_select %p77, %s78, %s79
      %p83 = pneg %p77
      %p84 = scmp.eq.s32.totalorder %s18, 1
      %p85 = por %p83, %p84
      %p86 = scmp.ne.s32.totalorder %s78, %s81
      %p87 = scmp.eq.s32.totalorder %s18, 0
      %p88 = por %p86, %p87
      %p89 = scmp.ne.s32.totalorder %s78, %s81
      %p90 = scmp.eq.s32.totalorder %s23, 1
      %p91 = por %p89, %p90
      %p92 = scmp.ne.s32.totalorder %s81, %s82
      %p93 = scmp.eq.s32.totalorder %s23, 0
      %p94 = por %p92, %p93
      %p95 = scmp.ne.s32.totalorder %s81, %s82
      %p96 = scmp.eq.s32.totalorder %s24, 1
      %p97 = por %p95, %p96
      %p99 = scmp.ne.s32.totalorder %s82, %s98
      %p100 = scmp.eq.s32.totalorder %s24, 0
      %p101 = por %p99, %p100
      %s103 = sadd.s32 %s102, 1
      %p106 = scmp.eq.s32.totalorder %s18, 1
      %p107 = scmp.ne.s32.totalorder %s102, %s104
      %p108 = scmp.eq.s32.totalorder %s18, 0
      %p109 = por %p107, %p108
      %p110 = scmp.ne.s32.totalorder %s102, %s104
      %p111 = scmp.eq.s32.totalorder %s23, 1
      %p112 = por %p110, %p111
      %p113 = scmp.ne.s32.totalorder %s104, %s105
      %p114 = scmp.eq.s32.totalorder %s23, 0
      %p115 = por %p113, %p114
      %p116 = scmp.ne.s32.totalorder %s104, %s105
      %p117 = scmp.eq.s32.totalorder %s24, 1
      %p118 = por %p116, %p117
      %p120 = scmp.ne.s32.totalorder %s105, %s119
      %p121 = scmp.eq.s32.totalorder %s24, 0
      %p122 = por %p120, %p121
      %s123 = ssub.s32 %s25, %s37
      %p124 = scmp.eq.s32.totalorder %s123, 0
      %s126 = sadd.s32 %s125, 1
      %s127 = scalar_select %p124, %s125, %s126
      %p130 = pneg %p124
      %p131 = scmp.eq.s32.totalorder %s18, 1
      %p132 = por %p130, %p131
      %p133 = scmp.ne.s32.totalorder %s125, %s128
      %p134 = scmp.eq.s32.totalorder %s18, 0
      %p135 = por %p133, %p134
      %p136 = scmp.ne.s32.totalorder %s125, %s128
      %p137 = scmp.eq.s32.totalorder %s23, 1
      %p138 = por %p136, %p137
      %p139 = scmp.ne.s32.totalorder %s128, %s129
      %p140 = scmp.eq.s32.totalorder %s23, 0
      %p141 = por %p139, %p140
      %p142 = scmp.ne.s32.totalorder %s128, %s129
      %p143 = scmp.eq.s32.totalorder %s24, 1
      %p144 = por %p142, %p143
      %p146 = scmp.ne.s32.totalorder %s129, %s145
      %p147 = scmp.eq.s32.totalorder %s24, 0
      %p148 = por %p146, %p147
      %p149 = scmp.le.s32.totalorder 1, %s18
      %p150 = scmp.lt.s32.totalorder %s18, 3
      %p151 = pnand %p149, %p150
      %p152 = pneg %p151
      // Predicated region
      $region9: #{tpu_custom_call.1} parent=5 // pred_check
        _
      $region10: #{tpu_custom_call.1} parent=5 // pred_check_branch
        %154 = sbr.rel (%p151) target = $region12
      $region11: #{tpu_custom_call.1} parent=5 // pred_region
        %s155 = ssub.s32 %s18, 1
        // Predicated region
        $region13: #{tpu_custom_call.1} parent=11 // pred_check
          %p156 = pneg %p115
        $region14: #{tpu_custom_call.1} parent=11 // pred_check_branch
          %158 = sbr.rel (%p156) target = $region16
        $region15: #{tpu_custom_call.1} parent=11 // pred_region
          _
        $region16: #{tpu_custom_call.1} parent=11 // pred_fallthru
          _
      $region12: #{tpu_custom_call.1} parent=5 // pred_fallthru
        _
      %p159 = scmp.lt.s32.totalorder %s18, 2
      // Predicated region
      $region17: #{tpu_custom_call.1} parent=5 // pred_check
        %p160 = pneg %p159
      $region18: #{tpu_custom_call.1} parent=5 // pred_check_branch
        %162 = sbr.rel (%p160) target = $region20
      $region19: #{tpu_custom_call.1} parent=5 // pred_region
        // Predicated region
        $region21: #{tpu_custom_call.1} parent=19 // pred_check
          %p163 = pneg %p56
        $region22: #{tpu_custom_call.1} parent=19 // pred_check_branch
          %165 = sbr.rel (%p163) target = $region24
        $region23: #{tpu_custom_call.1} parent=19 // pred_region
          %s166 = sand.u32 %s46, 1
          %s167 = scalar_lea.sflag [#allocation4], %s166
          %s168 = sand.u32 %s46, 1
          %s169 = smul.addr %s168, 32
          %s170 = scalar_lea.vmem [#allocation3], %s169
          %s171 = sadd.s32 %s25, %s26
          %p172 = scmp.lt.s32.totalorder %s171, 1
          %s173 = scalar_select %p172, %s171, 1
          %s174 = smul.u32 4, %s173
          %s175 = ssub.s32 5, %s174
          %p176 = scmp.lt.s32.totalorder %s175, 4
          %s177 = scalar_select %p176, %s175, 4
          %s178 = smul.u32 128, %s177
          %s180 = ssub.s32 512, %s178
          %181 = vsyncadd %s167, %s180
          %p182 = scmp.ne.s32.totalorder 0, %s178
          %s183 = smul.addr %s174, 128
          %s184 = scalar_lea.hbm %s0, %s183
          %s185 = smul.u32 8, %s177
          %s186 = sshll.u32 %s170, 4
          %s187 = int_to_ptr.vmem [resolvable:$true] %s186
          %s188 = sshll.u32 %s185, 4
          %192 = dma.hbm_to_vmem [thread:$0]  (%p182), %s184, %s188, %s187, %s167, 128, 128, 8
        $region24: #{tpu_custom_call.1} parent=19 // pred_fallthru
          _
        // Predicated region
        $region25: #{tpu_custom_call.1} parent=19 // pred_check
          %p193 = pneg %p88
        $region26: #{tpu_custom_call.1} parent=19 // pred_check_branch
          %195 = sbr.rel (%p193) target = $region28
        $region27: #{tpu_custom_call.1} parent=19 // pred_region
          %s196 = sand.u32 %s78, 1
          %s197 = scalar_lea.sflag [#allocation7], %s196
          %s198 = sand.u32 %s78, 1
          %s199 = smul.addr %s198, 8
          %s200 = scalar_lea.vmem [#allocation6], %s199
          %s201 = sadd.s32 %s25, %s26
          %p202 = scmp.lt.s32.totalorder %s201, 1
          %s203 = scalar_select %p202, %s201, 1
          %s204 = smul.u32 4, %s203
          %s205 = ssub.s32 5, %s204
          %p206 = scmp.lt.s32.totalorder %s205, 4
          %s207 = scalar_select %p206, %s205, 4
          %s208 = smul.u32 32, %s207
          %s210 = ssub.s32 128, %s208
          %211 = vsyncadd %s197, %s210
          %p212 = scmp.ne.s32.totalorder 0, %s208
          %s213 = smul.addr %s204, 32
          %s214 = scalar_lea.hbm %s1, %s213
          %s215 = smul.u32 2, %s207
          %s216 = sshll.u32 %s200, 4
          %s217 = int_to_ptr.vmem [resolvable:$true] %s216
          %s218 = sshll.u32 %s215, 4
          %222 = dma.hbm_to_vmem [thread:$0]  (%p212), %s214, %s218, %s217, %s197, 32, 32, 2
        $region28: #{tpu_custom_call.1} parent=19 // pred_fallthru
          _
      $region20: #{tpu_custom_call.1} parent=5 // pred_fallthru
        _
      %p223 = scmp.le.s32.totalorder 1, %s18
      %p224 = scmp.lt.s32.totalorder %s18, 3
      %p225 = pnand %p223, %p224
      %p226 = pneg %p225
      // Predicated region
      $region29: #{tpu_custom_call.1} parent=5 // pred_check
        _
      $region30: #{tpu_custom_call.1} parent=5 // pred_check_branch
        %228 = sbr.rel (%p225) target = $region32
      $region31: #{tpu_custom_call.1} parent=5 // pred_region
        %s229 = ssub.s32 %s18, 1
        %s230 = sand.u32 %s49, 1
        %s231 = scalar_lea.sflag [#allocation4], %s230
        %s232 = sand.u32 %s49, 1
        %s233 = smul.addr %s232, 32
        %s234 = scalar_lea.vmem [#allocation3], %s233
        // Predicated region
        $region33: #{tpu_custom_call.1} parent=31 // pred_check
          %p235 = pneg %p62
        $region34: #{tpu_custom_call.1} parent=31 // pred_check_branch
          %237 = sbr.rel (%p235) target = $region36
        $region35: #{tpu_custom_call.1} parent=31 // pred_region
          %238 = dma.done %s231, 512
        $region36: #{tpu_custom_call.1} parent=31 // pred_fallthru
          _
        %s239 = sand.u32 %s81, 1
        %s240 = scalar_lea.sflag [#allocation7], %s239
        %s241 = sand.u32 %s81, 1
        %s242 = smul.addr %s241, 8
        %s243 = scalar_lea.vmem [#allocation6], %s242
        // Predicated region
        $region37: #{tpu_custom_call.1} parent=31 // pred_check
          %p244 = pneg %p94
        $region38: #{tpu_custom_call.1} parent=31 // pred_check_branch
          %246 = sbr.rel (%p244) target = $region40
        $region39: #{tpu_custom_call.1} parent=31 // pred_region
          %247 = dma.done %s240, 128
        $region40: #{tpu_custom_call.1} parent=31 // pred_fallthru
          _
        %s248 = sand.u32 %s49, 1
        %s249 = scalar_lea.sflag [#allocation4], %s248
        %s250 = sand.u32 %s49, 1
        %s251 = smul.addr %s250, 32
        %s252 = scalar_lea.vmem [#allocation3], %s251
        %p253 = pneg %p62
        %p254 = pneg %p59
        %s255 = sand.u32 %s81, 1
        %s256 = scalar_lea.sflag [#allocation7], %s255
        %s257 = sand.u32 %s81, 1
        %s258 = smul.addr %s257, 8
        %s259 = scalar_lea.vmem [#allocation6], %s258
        %p260 = pneg %p94
        %p261 = pneg %p91
        %p262 = pneg %p115
        %p263 = pneg %p112
        %p264 = pneg %p141
        %p265 = pneg %p138
        %s266 = sand.u32 %s128, 1
        %s267 = scalar_lea.sflag [#allocation5], %s266
        %s268 = sand.u32 %s128, 1
        %s269 = smul.addr %s268, 8
        %s270 = scalar_lea.vmem [#allocation8], %s269
        %s271 = sadd.s32 %s27, %s28
        %p272 = scmp.lt.s32.totalorder %s271, 1
        %s273 = scalar_select %p272, %s271, 1
        %s274 = smul.u32 4, %s273
        %s275 = ssub.s32 5, %s274
        %p276 = scmp.lt.s32.totalorder %s275, 4
        %s277 = scalar_select %p276, %s275, 4
        %s278 = smul.u32 128, %s277
        %s279 = sadd.s32 %s27, %s28
        %p280 = scmp.lt.s32.totalorder %s279, 1
        %s281 = scalar_select %p280, %s279, 1
        %s282 = smul.u32 4, %s281
        %s283 = ssub.s32 5, %s282
        %p284 = scmp.lt.s32.totalorder %s283, 4
        %s285 = scalar_select %p284, %s283, 4
        %s286 = smul.u32 32, %s285
        %p287 = scmp.eq.s32.totalorder %s28, 0
        // Predicated region
        $region41: #{tpu_custom_call.1} parent=31 // pred_check
          %p288 = pneg %p287
        $region42: #{tpu_custom_call.1} parent=31 // pred_check_branch
          %290 = sbr.rel (%p288) target = $region44
        $region43: #{tpu_custom_call.1} parent=31 // pred_region
          %291 = vst [vmem:[#allocation2] sm:$0x1] 0.0
        $region44: #{tpu_custom_call.1} parent=31 // pred_fallthru
          _
        %v292 = vld [vmem:[%s234] sm:$0xff]
        %v293 = vld [vmem:[%s234 + $0x8] sm:$0xff]
        %v294 = vld [vmem:[%s234 + $0x10] sm:$0xff]
        %v295 = vld [vmem:[%s234 + $0x18] sm:$0xff]
        %v296 = vld [vmem:[%s243] sm:$0x3]
        %v297 = vld [vmem:[%s243 + $0x2] sm:$0x3]
        %v298 = vld [vmem:[%s243 + $0x4] sm:$0x3]
        %v299 = vld [vmem:[%s243 + $0x6] sm:$0x3]
        %v300 = vunpack.c.0.s8 %v296
        %v301 = vunpack.c.0.s8 %v297
        %v302 = vunpack.c.0.s8 %v298
        %v303 = vunpack.c.0.s8 %v299
        %v304 = vcvt.s32.f32 %v300
        %v305 = vcvt.s32.f32 %v301
        %v306 = vcvt.s32.f32 %v302
        %v307 = vcvt.s32.f32 %v303
        %v308 = vld [vmem:[%s2] sm:$0x1]
        %v309 = vld [vmem:[%s2 + $0x1] sm:$0x1]
        %v310 = vand.u32 2147483647, %v292
        %v311 = vand.u32 2147483647, %v293
        %v312 = vand.u32 2147483647, %v294
        %v313 = vand.u32 2147483647, %v295
        %v314 = vsub.f32 0.0, %v310
        %v315 = vsub.f32 0.0, %v311
        %v316 = vsub.f32 0.0, %v312
        %v317 = vsub.f32 0.0, %v313
        %v318 = vmul.f32 %v314, 1.442695
        %v319 = vpow.pop %v318
        %v320 = vmul.f32 %v315, 1.442695
        %v321 = vpow.pop %v320
        %v322 = vmul.f32 %v316, 1.442695
        %v323 = vpow.pop %v322
        %v324 = vmul.f32 %v317, 1.442695
        %v325 = vpow.pop %v324
        %v326 = vmax.f32 %v292, 0.0
        %v327 = vmax.f32 %v293, 0.0
        %v328 = vmax.f32 %v294, 0.0
        %v329 = vmax.f32 %v295, 0.0
        %v330 = vmul.f32 %v292, %v304
        %v331 = vmul.f32 %v293, %v305
        %v332 = vmul.f32 %v294, %v306
        %v333 = vmul.f32 %v295, %v307
        %v334 = vsub.f32 %v326, %v330
        %v335 = vsub.f32 %v327, %v331
        %v336 = vsub.f32 %v328, %v332
        %v337 = vsub.f32 %v329, %v333
        %v338 = vadd.f32 %v319, 1.0
        %v339 = vlog2.pop %v338
        %v340 = vmul.f32 %v339, 0.6931472
        %v341 = vmul.f32 -0.5, %v319
        %v342 = vadd.f32 %v341, 1.0
        %v343 = vmul.f32 %v342, %v319
        %v344 = vand.u32 2147483647, %v319
        %vm345 = vcmp.lt.f32.partialorder %v344, 0.0004427343
        %v346 = vsel %vm345, %v343, %v340
        %v347 = vadd.f32 %v321, 1.0
        %v348 = vlog2.pop %v347
        %v349 = vmul.f32 %v348, 0.6931472
        %v350 = vmul.f32 -0.5, %v321
        %v351 = vadd.f32 %v350, 1.0
        %v352 = vmul.f32 %v351, %v321
        %v353 = vand.u32 2147483647, %v321
        %vm354 = vcmp.lt.f32.partialorder %v353, 0.0004427343
        %v355 = vsel %vm354, %v352, %v349
        %v356 = vadd.f32 %v323, 1.0
        %v357 = vlog2.pop %v356
        %v358 = vmul.f32 %v357, 0.6931472
        %v359 = vmul.f32 -0.5, %v323
        %v360 = vadd.f32 %v359, 1.0
        %v361 = vmul.f32 %v360, %v323
        %v362 = vand.u32 2147483647, %v323
        %vm363 = vcmp.lt.f32.partialorder %v362, 0.0004427343
        %v364 = vsel %vm363, %v361, %v358
        %v365 = vadd.f32 %v325, 1.0
        %v366 = vlog2.pop %v365
        %v367 = vmul.f32 %v366, 0.6931472
        %v368 = vmul.f32 -0.5, %v325
        %v369 = vadd.f32 %v368, 1.0
        %v370 = vmul.f32 %v369, %v325
        %v371 = vand.u32 2147483647, %v325
        %vm372 = vcmp.lt.f32.partialorder %v371, 0.0004427343
        %v373 = vsel %vm372, %v370, %v367
        %v374 = vadd.f32 %v334, %v346
        %v375 = vadd.f32 %v335, %v355
        %v376 = vadd.f32 %v336, %v364
        %v377 = vadd.f32 %v337, %v373
        %v378 = vmul.f32 %v304, 2.0
        %v379 = vmul.f32 %v305, 2.0
        %v380 = vmul.f32 %v306, 2.0
        %v381 = vmul.f32 %v307, 2.0
        %v382 = vsub.f32 1.0, %v378
        %v383 = vsub.f32 1.0, %v379
        %v384 = vsub.f32 1.0, %v380
        %v385 = vsub.f32 1.0, %v381
        %v386 = vmul.f32 %v382, %v292
        %v387 = vmul.f32 %v383, %v293
        %v388 = vmul.f32 %v384, %v294
        %v389 = vmul.f32 %v385, %v295
        %vm390 = vcmp.gt.f32.partialorder %v386, 0.0
        %vm391 = vcmp.gt.f32.partialorder %v387, 0.0
        %vm392 = vcmp.gt.f32.partialorder %v388, 0.0
        %vm393 = vcmp.gt.f32.partialorder %v389, 0.0
        %v394 = vsel %vm390, %v319, 1.0
        %v395 = vsel %vm391, %v321, 1.0
        %v396 = vsel %vm392, %v323, 1.0
        %v397 = vsel %vm393, %v325, 1.0
        %v398 = vadd.f32 %v319, 1.0
        %v399 = vadd.f32 %v321, 1.0
        %v400 = vadd.f32 %v323, 1.0
        %v401 = vadd.f32 %v325, 1.0
        %v402 = vrcp.pop %v398
        %v403 = vrcp.pop %v399
        %v404 = vrcp.pop %v400
        %v405 = vrcp.pop %v401
        %v406 = vmul.f32 %v394, %v402
        %v407 = vmul.f32 %v395, %v403
        %v408 = vmul.f32 %v396, %v404
        %v409 = vmul.f32 %v397, %v405
        %v410 = vlaneseq
        %v411 = vshrl.u32 %v410, 7
        %v412 = vsub.s32 0, %v411
        %v413 = vrot.slane %v309, %v412
        %v414 = vmul.f32 %v304, %v413
        %v415 = vmul.f32 %v305, %v413
        %v416 = vmul.f32 %v306, %v413
        %v417 = vmul.f32 %v307, %v413
        %v418 = vlaneseq
        %v419 = vshrl.u32 %v418, 7
        %v420 = vsub.s32 0, %v419
        %v421 = vrot.slane %v308, %v420
        %v422 = vadd.f32 %v421, %v414
        %v423 = vadd.f32 %v421, %v415
        %v424 = vadd.f32 %v421, %v416
        %v425 = vadd.f32 %v421, %v417
        %v426 = vsub.f32 1.0, %v406
        %v427 = vsub.f32 1.0, %v407
        %v428 = vsub.f32 1.0, %v408
        %v429 = vsub.f32 1.0, %v409
        %v430 = vmul.f32 %v426, %v426
        %v431 = vmul.f32 %v427, %v427
        %v432 = vmul.f32 %v428, %v428
        %v433 = vmul.f32 %v429, %v429
        %v434 = vmul.f32 %v422, %v430
        %v435 = vmul.f32 %v423, %v431
        %v436 = vmul.f32 %v424, %v432
        %v437 = vmul.f32 %v425, %v433
        %v438 = vmul.f32 %v434, %v374
        %v439 = vmul.f32 %v435, %v375
        %v440 = vmul.f32 %v436, %v376
        %v441 = vmul.f32 %v437, %v377
        %s442 = sadd.s32 %s27, %s28
        %s443 = smul.u32 %s442, 32
        %s444 = sadd.s32 %s443, 32
        %s445 = smul.u32 %s444, 128
        %p446 = scmp.gt.s32.totalorder %s445, 4224
        // Predicated region
        $region45: #{tpu_custom_call.1} parent=31 // pred_check
          %p447 = pneg %p446
        $region46: #{tpu_custom_call.1} parent=31 // pred_check_branch
          %449 = sbr.rel (%p447) target = $region48
        $region47: #{tpu_custom_call.1} parent=31 // pred_region
          %v450 = vlaneseq
          %v451 = vshrl.u32 %v450, 7
          %v452 = vadd.s32 %v451, 8
          %v453 = vadd.s32 %v451, 16
          %v454 = vadd.s32 %v451, 24
          %v455 = vstv %s443
          %v456 = vadd.s32 %v455, %v451
          %v457 = vadd.s32 %v455, %v452
          %v458 = vadd.s32 %v455, %v453
          %v459 = vadd.s32 %v455, %v454
          %vm460 = vcmp.lt.s32.totalorder %v456, 33
          %vm461 = vcmp.lt.s32.totalorder %v457, 33
          %vm462 = vcmp.lt.s32.totalorder %v458, 33
          %vm463 = vcmp.lt.s32.totalorder %v459, 33
          %v464 = vsel %vm460, %v438, 0.0
          %v465 = vsel %vm461, %v439, 0.0
          %v466 = vsel %vm462, %v440, 0.0
          %v467 = vsel %vm463, %v441, 0.0
          %v468 = vld [vmem:[#allocation2] sm:$0x1]
          %v469 = vadd.f32 %v464, %v465
          %v470 = vadd.f32 %v469, %v466
          %v471 = vadd.f32 %v470, %v467
          %v472 = vrot.slane %v471, 4
          %v473 = vadd.f32 %v471, %v472
          %v474 = vrot.slane %v473, 2
          %v475 = vadd.f32 %v473, %v474
          %v476 = vrot.slane %v475, 1
          %v477 = vadd.f32 %v475, %v476
          %v478 = vadd.f32 %v468, %v477
          %479 = vst [vmem:[#allocation2] sm:$0x1] %v478
        $region48: #{tpu_custom_call.1} parent=31 // pred_fallthru
          _
        %p480 = scmp.le.s32.totalorder %s445, 4224
        // Predicated region
        $region49: #{tpu_custom_call.1} parent=31 // pred_check
          %p481 = pneg %p480
        $region50: #{tpu_custom_call.1} parent=31 // pred_check_branch
          %483 = sbr.rel (%p481) target = $region52
        $region51: #{tpu_custom_call.1} parent=31 // pred_region
          %v484 = vld [vmem:[#allocation2] sm:$0x1]
          %v485 = vadd.f32 %v438, %v439
          %v486 = vadd.f32 %v485, %v440
          %v487 = vadd.f32 %v486, %v441
          %v488 = vrot.slane %v487, 4
          %v489 = vadd.f32 %v487, %v488
          %v490 = vrot.slane %v489, 2
          %v491 = vadd.f32 %v489, %v490
          %v492 = vrot.slane %v491, 1
          %v493 = vadd.f32 %v491, %v492
          %v494 = vadd.f32 %v484, %v493
          %495 = vst [vmem:[#allocation2] sm:$0x1] %v494
        $region52: #{tpu_custom_call.1} parent=31 // pred_fallthru
          _
        // Predicated region
        $region53: #{tpu_custom_call.1} parent=31 // pred_check
          %p496 = pneg %p287
        $region54: #{tpu_custom_call.1} parent=31 // pred_check_branch
          %498 = sbr.rel (%p496) target = $region56
        $region55: #{tpu_custom_call.1} parent=31 // pred_region
          %v499 = vld [vmem:[#allocation2] sm:$0x1]
          %vm500 = vcmask 1040384
          %v501 = vsel %vm500, %v499, 0.0
          %502 = vadd.xlane.f32.xlu0 %v501
          %v503 = vpop.xlane.xlu0 %502
          %v504 = vrot.slane %v503, 4
          %v505 = vadd.f32 %v503, %v504
          %v506 = vrot.slane %v505, 2
          %v507 = vadd.f32 %v505, %v506
          %v508 = vrot.slane %v507, 1
          %v509 = vadd.f32 %v507, %v508
          %s510 = vtos %v509
          %v511 = vstv %s510
          %512 = vst [vmem:[%s270] sm:$0xff] %v511
        $region56: #{tpu_custom_call.1} parent=31 // pred_fallthru
          _
        %s513 = sand.u32 %s128, 1
        %s514 = scalar_lea.sflag [#allocation5], %s513
        %s515 = sand.u32 %s128, 1
        %s516 = smul.addr %s515, 8
        %s517 = scalar_lea.vmem [#allocation8], %s516
        // Predicated region
        $region57: #{tpu_custom_call.1} parent=31 // pred_check
          %p518 = pneg %p138
        $region58: #{tpu_custom_call.1} parent=31 // pred_check_branch
          %520 = sbr.rel (%p518) target = $region60
        $region59: #{tpu_custom_call.1} parent=31 // pred_region
          %s522 = ssub.s32 128, 128
          %523 = vsyncadd %s514, %s522
          %s524 = smul.addr %s27, 128
          %s525 = scalar_lea.hbm %s3, %s524
          %s527 = sshll.u32 %s517, 4
          %s528 = int_to_ptr.vmem [resolvable:$true] %s527
          %530 = dma.vmem_to_hbm [thread:$0]  %s528, 128, %s525, %s514
        $region60: #{tpu_custom_call.1} parent=31 // pred_fallthru
          _
      $region32: #{tpu_custom_call.1} parent=5 // pred_fallthru
        _
      %p531 = scmp.le.s32.totalorder 2, %s18
      // Predicated region
      $region61: #{tpu_custom_call.1} parent=5 // pred_check
        %p532 = pneg %p531
      $region62: #{tpu_custom_call.1} parent=5 // pred_check_branch
        %534 = sbr.rel (%p532) target = $region64
      $region63: #{tpu_custom_call.1} parent=5 // pred_region
        %s535 = ssub.s32 %s18, 2
        // Predicated region
        $region65: #{tpu_custom_call.1} parent=63 // pred_check
          %p536 = pneg %p144
        $region66: #{tpu_custom_call.1} parent=63 // pred_check_branch
          %538 = sbr.rel (%p536) target = $region68
        $region67: #{tpu_custom_call.1} parent=63 // pred_region
          %s539 = sand.u32 %s129, 1
          %s540 = scalar_lea.sflag [#allocation5], %s539
          %s541 = sand.u32 %s129, 1
          %s542 = smul.addr %s541, 8
          %s543 = scalar_lea.vmem [#allocation8], %s542
          %544 = dma.done %s540, 128
        $region68: #{tpu_custom_call.1} parent=63 // pred_fallthru
          _
      $region64: #{tpu_custom_call.1} parent=5 // pred_fallthru
        _
    $region6: #{tpu_custom_call.1} parent=1 // loop_footer
      %s22 = sadd.s32 1, %s18
    $region7: #{tpu_custom_call.1} parent=1 // loop_footer_branch
      %17 = sbr.rel target = $region3
    $region8: #{tpu_custom_call.1} parent=1 // loop_exit
      _
    %545 = vsyncpa [#allocation4], 1
    %s546 = scalar_lea.sflag [#allocation4], 1
    %547 = vsyncpa %s546, 1
    %548 = vsyncpa [#allocation7], 1
    %s549 = scalar_lea.sflag [#allocation7], 1
    %550 = vsyncpa %s549, 1
    %551 = vsyncpa [#allocation5], 1
    %s552 = scalar_lea.sflag [#allocation5], 1
    %553 = vsyncpa %s552, 1

</llo_original>
